<compile_context>
chip_gen: v7x
topology: tpu7x:2x2x1
jax: 0.10.0
libtpu: 0.0.40
codegen_flags: <defaults>
</compile_context>

<pallas_src>
import math
import functools

import jax
import jax.numpy as jnp
from jax.experimental import pallas as pl
from jax.experimental.pallas import tpu as pltpu


def _embed_gather_kernel(ids_ref, table_hbm, out_ref, buf, sems, *,
                         scale, token_block):
    # ids_ref:   (num_tokens,) int32, SMEM (scalar prefetch)
    # table_hbm: (vocab, d_model) f32 ref left in HBM (memory_space=pl.ANY)
    # out_ref:   (token_block, d_model) f32 VMEM tile (auto-pipelined output)
    # buf:       (2, token_block, d_model) f32 VMEM staging (double buffer)
    # sems:      (2, token_block) DMA semaphores
    i = pl.program_id(0)
    n = pl.num_programs(0)
    slot = i % 2

    def issue(step, dst_slot):
        base = step * token_block
        for t in range(token_block):
            row = ids_ref[base + t]
            pltpu.make_async_copy(
                table_hbm.at[pl.ds(row, 1), :],
                buf.at[dst_slot, pl.ds(t, 1), :],
                sems.at[dst_slot, t],
            ).start()

    def wait(dst_slot):
        for t in range(token_block):
            # Dummy src of matching shape; wait() only needs sem + copy size.
            pltpu.make_async_copy(
                table_hbm.at[pl.ds(0, 1), :],
                buf.at[dst_slot, pl.ds(t, 1), :],
                sems.at[dst_slot, t],
            ).wait()

    @pl.when(i == 0)
    def _():
        issue(0, 0)                     # prime the pipeline

    @pl.when(i + 1 < n)
    def _():
        issue(i + 1, 1 - slot)          # prefetch next step's rows

    wait(slot)
    out_ref[...] = (buf[slot] * scale).astype(out_ref.dtype)


def embeddings_forward(x, table, *, token_block=128):
    """x: int32 (batch, seq); table: f32 (vocab, d_model) -> (batch, seq, d_model)."""
    batch, seq = x.shape
    vocab, d_model = table.shape
    scale = math.sqrt(d_model)

    num_tokens = batch * seq
    token_block = min(token_block, num_tokens)
    assert num_tokens % token_block == 0, "pad tokens to a multiple of token_block"
    ids_flat = x.reshape(num_tokens).astype(jnp.int32)

    grid = (num_tokens // token_block,)

    out_flat = pl.pallas_call(
        functools.partial(_embed_gather_kernel, scale=scale,
                          token_block=token_block),
        out_shape=jax.ShapeDtypeStruct((num_tokens, d_model), table.dtype),
        grid_spec=pltpu.PrefetchScalarGridSpec(
            num_scalar_prefetch=1,                        # ids -> SMEM
            grid=grid,
            in_specs=[pl.BlockSpec(memory_space=pl.ANY)],  # table stays in HBM
            out_specs=pl.BlockSpec((token_block, d_model),
                                   lambda i, ids: (i, 0)),
            scratch_shapes=[
                pltpu.VMEM((2, token_block, d_model), table.dtype),
                pltpu.SemaphoreType.DMA((2, token_block)),
            ],
        ),
        compiler_params=pltpu.CompilerParams(
            # Token axis kept sequential: the cross-step DMA prefetch reads
            # step i+1's ids, which must stay on the same core.
            dimension_semantics=("arbitrary",),
        ),
    )(ids_flat, table)

    return out_flat.reshape(batch, seq, d_model)


if __name__ == "__main__":
    # Small, deterministic config consistent with the Embeddings forward.
    vocab = 64
    d_model = 128
    batch, seq = 2, 8

    key = jax.random.PRNGKey(0)
    k_tab, k_ids = jax.random.split(key)
    # nn.Embedding default init: N(0, 1)  (out-of-range ids are assumed absent,
    # matching PyTorch semantics where they'd be an error anyway).
    table = jax.random.normal(k_tab, (vocab, d_model), dtype=jnp.float32)
    x = jax.random.randint(k_ids, (batch, seq), 0, vocab, dtype=jnp.int32)

    # token_block=8 -> 2 grid steps, exercising the double-buffered prefetch.
    out = embeddings_forward(x, table, token_block=8)
    out = jax.block_until_ready(out)

    # Reference check in plain JAX.
    ref = table[x] * math.sqrt(d_model)
    assert out.shape == (batch, seq, d_model)
    assert jnp.allclose(out, ref, atol=1e-5, rtol=1e-5)

    print("KERNEL_OK")
</pallas_src>

<mosaic_0001>
module attributes {stable_mosaic.version = 11 : i64} {
  func.func @_embed_gather_kernel(%arg0: i32, %arg1: memref<16xi32, #tpu.memory_space<smem>>, %arg2: memref<64x128xf32, #tpu.memory_space<any>>, %arg3: memref<8x128xf32, #tpu.memory_space<vmem>>, %arg4: memref<2x8x128xf32, #tpu.memory_space<vmem>>, %arg5: memref<2x8x!tpu.dma_semaphore, #tpu.memory_space<semaphore_mem>>) attributes {dimension_semantics = [#tpu.dimension_semantics<arbitrary>], iteration_bounds = array<i64: 2>, scalar_prefetch = 1 : i64, scratch_operands = 2 : i64, tpu.core_type = #tpu.core_type<tc>, window_params = [{}, {transform_indices = @transform_1, window_bounds = array<i64: 8, 128>}]} {
    %c2_i32 = arith.constant 2 : i32
    %c0_i32 = arith.constant 0 : i32
    %0 = arith.cmpi eq, %c2_i32, %c0_i32 : i32
    %c1_i32 = arith.constant 1 : i32
    %1 = arith.select %0, %c1_i32, %c2_i32 : i32
    %2 = arith.remsi %arg0, %1 : i32
    %c0_i32_0 = arith.constant 0 : i32
    %3 = arith.cmpi ne, %2, %c0_i32_0 : i32
    %c0_i32_1 = arith.constant 0 : i32
    %4 = arith.cmpi slt, %2, %c0_i32_1 : i32
    %c0_i32_2 = arith.constant 0 : i32
    %5 = arith.cmpi slt, %1, %c0_i32_2 : i32
    %6 = arith.xori %4, %5 : i1
    %7 = arith.andi %6, %3 : i1
    %8 = arith.addi %2, %1 : i32
    %9 = arith.select %7, %8, %2 : i32
    %c0_i32_3 = arith.constant 0 : i32
    %10 = arith.cmpi eq, %arg0, %c0_i32_3 : i32
    %11 = arith.extui %10 : i1 to i32
    %c0_i32_4 = arith.constant 0 : i32
    %12 = arith.cmpi ne, %11, %c0_i32_4 : i32
    scf.if %12 {
      %c0_46 = arith.constant 0 : index
      %63 = memref.load %arg1[%c0_46] : memref<16xi32, #tpu.memory_space<smem>>
      %c0_i32_47 = arith.constant 0 : i32
      %c0_i32_48 = arith.constant 0 : i32
      %c0_i32_49 = arith.constant 0 : i32
      %c0_i32_50 = arith.constant 0 : i32
      %64 = tpu.memref_slice %arg2[%63, %c0_i32_50] : memref<64x128xf32, #tpu.memory_space<any>> -> memref<1x128xf32, #tpu.memory_space<any>>
      %c0_i32_51 = arith.constant 0 : i32
      %c0_i32_52 = arith.constant 0 : i32
      %65 = tpu.memref_slice %arg4[%c0_i32_47, %c0_i32_51, %c0_i32_52] : memref<2x8x128xf32, #tpu.memory_space<vmem>> -> memref<1x1x128xf32, #tpu.memory_space<vmem>>
      %66 = tpu.memref_squeeze %65 : memref<1x1x128xf32, #tpu.memory_space<vmem>> -> memref<1x128xf32, #tpu.memory_space<vmem>>
      %67 = tpu.memref_slice %arg5[%c0_i32_48, %c0_i32_49] : memref<2x8x!tpu.dma_semaphore, #tpu.memory_space<semaphore_mem>> -> memref<1x1x!tpu.dma_semaphore, #tpu.memory_space<semaphore_mem>>
      %68 = tpu.memref_squeeze %67 : memref<1x1x!tpu.dma_semaphore, #tpu.memory_space<semaphore_mem>> -> memref<!tpu.dma_semaphore, #tpu.memory_space<semaphore_mem>>
      tpu.enqueue_dma source(%64 : memref<1x128xf32, #tpu.memory_space<any>>) target(%66 : memref<1x128xf32, #tpu.memory_space<vmem>>) target_semaphore(%68 : memref<!tpu.dma_semaphore, #tpu.memory_space<semaphore_mem>>)
      %c1 = arith.constant 1 : index
      %69 = memref.load %arg1[%c1] : memref<16xi32, #tpu.memory_space<smem>>
      %c0_i32_53 = arith.constant 0 : i32
      %c0_i32_54 = arith.constant 0 : i32
      %c1_i32_55 = arith.constant 1 : i32
      %c0_i32_56 = arith.constant 0 : i32
      %70 = tpu.memref_slice %arg2[%69, %c0_i32_56] : memref<64x128xf32, #tpu.memory_space<any>> -> memref<1x128xf32, #tpu.memory_space<any>>
      %c1_i32_57 = arith.constant 1 : i32
      %c0_i32_58 = arith.constant 0 : i32
      %71 = tpu.memref_slice %arg4[%c0_i32_53, %c1_i32_57, %c0_i32_58] : memref<2x8x128xf32, #tpu.memory_space<vmem>> -> memref<1x1x128xf32, #tpu.memory_space<vmem>>
      %72 = tpu.memref_squeeze %71 : memref<1x1x128xf32, #tpu.memory_space<vmem>> -> memref<1x128xf32, #tpu.memory_space<vmem>>
      %73 = tpu.memref_slice %arg5[%c0_i32_54, %c1_i32_55] : memref<2x8x!tpu.dma_semaphore, #tpu.memory_space<semaphore_mem>> -> memref<1x1x!tpu.dma_semaphore, #tpu.memory_space<semaphore_mem>>
      %74 = tpu.memref_squeeze %73 : memref<1x1x!tpu.dma_semaphore, #tpu.memory_space<semaphore_mem>> -> memref<!tpu.dma_semaphore, #tpu.memory_space<semaphore_mem>>
      tpu.enqueue_dma source(%70 : memref<1x128xf32, #tpu.memory_space<any>>) target(%72 : memref<1x128xf32, #tpu.memory_space<vmem>>) target_semaphore(%74 : memref<!tpu.dma_semaphore, #tpu.memory_space<semaphore_mem>>)
      %c2 = arith.constant 2 : index
      %75 = memref.load %arg1[%c2] : memref<16xi32, #tpu.memory_space<smem>>
      %c0_i32_59 = arith.constant 0 : i32
      %c0_i32_60 = arith.constant 0 : i32
      %c2_i32_61 = arith.constant 2 : i32
      %c0_i32_62 = arith.constant 0 : i32
      %76 = tpu.memref_slice %arg2[%75, %c0_i32_62] : memref<64x128xf32, #tpu.memory_space<any>> -> memref<1x128xf32, #tpu.memory_space<any>>
      %c2_i32_63 = arith.constant 2 : i32
      %c0_i32_64 = arith.constant 0 : i32
      %77 = tpu.memref_slice %arg4[%c0_i32_59, %c2_i32_63, %c0_i32_64] : memref<2x8x128xf32, #tpu.memory_space<vmem>> -> memref<1x1x128xf32, #tpu.memory_space<vmem>>
      %78 = tpu.memref_squeeze %77 : memref<1x1x128xf32, #tpu.memory_space<vmem>> -> memref<1x128xf32, #tpu.memory_space<vmem>>
      %79 = tpu.memref_slice %arg5[%c0_i32_60, %c2_i32_61] : memref<2x8x!tpu.dma_semaphore, #tpu.memory_space<semaphore_mem>> -> memref<1x1x!tpu.dma_semaphore, #tpu.memory_space<semaphore_mem>>
      %80 = tpu.memref_squeeze %79 : memref<1x1x!tpu.dma_semaphore, #tpu.memory_space<semaphore_mem>> -> memref<!tpu.dma_semaphore, #tpu.memory_space<semaphore_mem>>
      tpu.enqueue_dma source(%76 : memref<1x128xf32, #tpu.memory_space<any>>) target(%78 : memref<1x128xf32, #tpu.memory_space<vmem>>) target_semaphore(%80 : memref<!tpu.dma_semaphore, #tpu.memory_space<semaphore_mem>>)
      %c3 = arith.constant 3 : index
      %81 = memref.load %arg1[%c3] : memref<16xi32, #tpu.memory_space<smem>>
      %c0_i32_65 = arith.constant 0 : i32
      %c0_i32_66 = arith.constant 0 : i32
      %c3_i32_67 = arith.constant 3 : i32
      %c0_i32_68 = arith.constant 0 : i32
      %82 = tpu.memref_slice %arg2[%81, %c0_i32_68] : memref<64x128xf32, #tpu.memory_space<any>> -> memref<1x128xf32, #tpu.memory_space<any>>
      %c3_i32_69 = arith.constant 3 : i32
      %c0_i32_70 = arith.constant 0 : i32
      %83 = tpu.memref_slice %arg4[%c0_i32_65, %c3_i32_69, %c0_i32_70] : memref<2x8x128xf32, #tpu.memory_space<vmem>> -> memref<1x1x128xf32, #tpu.memory_space<vmem>>
      %84 = tpu.memref_squeeze %83 : memref<1x1x128xf32, #tpu.memory_space<vmem>> -> memref<1x128xf32, #tpu.memory_space<vmem>>
      %85 = tpu.memref_slice %arg5[%c0_i32_66, %c3_i32_67] : memref<2x8x!tpu.dma_semaphore, #tpu.memory_space<semaphore_mem>> -> memref<1x1x!tpu.dma_semaphore, #tpu.memory_space<semaphore_mem>>
      %86 = tpu.memref_squeeze %85 : memref<1x1x!tpu.dma_semaphore, #tpu.memory_space<semaphore_mem>> -> memref<!tpu.dma_semaphore, #tpu.memory_space<semaphore_mem>>
      tpu.enqueue_dma source(%82 : memref<1x128xf32, #tpu.memory_space<any>>) target(%84 : memref<1x128xf32, #tpu.memory_space<vmem>>) target_semaphore(%86 : memref<!tpu.dma_semaphore, #tpu.memory_space<semaphore_mem>>)
      %c4 = arith.constant 4 : index
      %87 = memref.load %arg1[%c4] : memref<16xi32, #tpu.memory_space<smem>>
      %c0_i32_71 = arith.constant 0 : i32
      %c0_i32_72 = arith.constant 0 : i32
      %c4_i32_73 = arith.constant 4 : i32
      %c0_i32_74 = arith.constant 0 : i32
      %88 = tpu.memref_slice %arg2[%87, %c0_i32_74] : memref<64x128xf32, #tpu.memory_space<any>> -> memref<1x128xf32, #tpu.memory_space<any>>
      %c4_i32_75 = arith.constant 4 : i32
      %c0_i32_76 = arith.constant 0 : i32
      %89 = tpu.memref_slice %arg4[%c0_i32_71, %c4_i32_75, %c0_i32_76] : memref<2x8x128xf32, #tpu.memory_space<vmem>> -> memref<1x1x128xf32, #tpu.memory_space<vmem>>
      %90 = tpu.memref_squeeze %89 : memref<1x1x128xf32, #tpu.memory_space<vmem>> -> memref<1x128xf32, #tpu.memory_space<vmem>>
      %91 = tpu.memref_slice %arg5[%c0_i32_72, %c4_i32_73] : memref<2x8x!tpu.dma_semaphore, #tpu.memory_space<semaphore_mem>> -> memref<1x1x!tpu.dma_semaphore, #tpu.memory_space<semaphore_mem>>
      %92 = tpu.memref_squeeze %91 : memref<1x1x!tpu.dma_semaphore, #tpu.memory_space<semaphore_mem>> -> memref<!tpu.dma_semaphore, #tpu.memory_space<semaphore_mem>>
      tpu.enqueue_dma source(%88 : memref<1x128xf32, #tpu.memory_space<any>>) target(%90 : memref<1x128xf32, #tpu.memory_space<vmem>>) target_semaphore(%92 : memref<!tpu.dma_semaphore, #tpu.memory_space<semaphore_mem>>)
      %c5 = arith.constant 5 : index
      %93 = memref.load %arg1[%c5] : memref<16xi32, #tpu.memory_space<smem>>
      %c0_i32_77 = arith.constant 0 : i32
      %c0_i32_78 = arith.constant 0 : i32
      %c5_i32_79 = arith.constant 5 : i32
      %c0_i32_80 = arith.constant 0 : i32
      %94 = tpu.memref_slice %arg2[%93, %c0_i32_80] : memref<64x128xf32, #tpu.memory_space<any>> -> memref<1x128xf32, #tpu.memory_space<any>>
      %c5_i32_81 = arith.constant 5 : i32
      %c0_i32_82 = arith.constant 0 : i32
      %95 = tpu.memref_slice %arg4[%c0_i32_77, %c5_i32_81, %c0_i32_82] : memref<2x8x128xf32, #tpu.memory_space<vmem>> -> memref<1x1x128xf32, #tpu.memory_space<vmem>>
      %96 = tpu.memref_squeeze %95 : memref<1x1x128xf32, #tpu.memory_space<vmem>> -> memref<1x128xf32, #tpu.memory_space<vmem>>
      %97 = tpu.memref_slice %arg5[%c0_i32_78, %c5_i32_79] : memref<2x8x!tpu.dma_semaphore, #tpu.memory_space<semaphore_mem>> -> memref<1x1x!tpu.dma_semaphore, #tpu.memory_space<semaphore_mem>>
      %98 = tpu.memref_squeeze %97 : memref<1x1x!tpu.dma_semaphore, #tpu.memory_space<semaphore_mem>> -> memref<!tpu.dma_semaphore, #tpu.memory_space<semaphore_mem>>
      tpu.enqueue_dma source(%94 : memref<1x128xf32, #tpu.memory_space<any>>) target(%96 : memref<1x128xf32, #tpu.memory_space<vmem>>) target_semaphore(%98 : memref<!tpu.dma_semaphore, #tpu.memory_space<semaphore_mem>>)
      %c6 = arith.constant 6 : index
      %99 = memref.load %arg1[%c6] : memref<16xi32, #tpu.memory_space<smem>>
      %c0_i32_83 = arith.constant 0 : i32
      %c0_i32_84 = arith.constant 0 : i32
      %c6_i32_85 = arith.constant 6 : i32
      %c0_i32_86 = arith.constant 0 : i32
      %100 = tpu.memref_slice %arg2[%99, %c0_i32_86] : memref<64x128xf32, #tpu.memory_space<any>> -> memref<1x128xf32, #tpu.memory_space<any>>
      %c6_i32_87 = arith.constant 6 : i32
      %c0_i32_88 = arith.constant 0 : i32
      %101 = tpu.memref_slice %arg4[%c0_i32_83, %c6_i32_87, %c0_i32_88] : memref<2x8x128xf32, #tpu.memory_space<vmem>> -> memref<1x1x128xf32, #tpu.memory_space<vmem>>
      %102 = tpu.memref_squeeze %101 : memref<1x1x128xf32, #tpu.memory_space<vmem>> -> memref<1x128xf32, #tpu.memory_space<vmem>>
      %103 = tpu.memref_slice %arg5[%c0_i32_84, %c6_i32_85] : memref<2x8x!tpu.dma_semaphore, #tpu.memory_space<semaphore_mem>> -> memref<1x1x!tpu.dma_semaphore, #tpu.memory_space<semaphore_mem>>
      %104 = tpu.memref_squeeze %103 : memref<1x1x!tpu.dma_semaphore, #tpu.memory_space<semaphore_mem>> -> memref<!tpu.dma_semaphore, #tpu.memory_space<semaphore_mem>>
      tpu.enqueue_dma source(%100 : memref<1x128xf32, #tpu.memory_space<any>>) target(%102 : memref<1x128xf32, #tpu.memory_space<vmem>>) target_semaphore(%104 : memref<!tpu.dma_semaphore, #tpu.memory_space<semaphore_mem>>)
      %c7 = arith.constant 7 : index
      %105 = memref.load %arg1[%c7] : memref<16xi32, #tpu.memory_space<smem>>
      %c0_i32_89 = arith.constant 0 : i32
      %c0_i32_90 = arith.constant 0 : i32
      %c7_i32_91 = arith.constant 7 : i32
      %c0_i32_92 = arith.constant 0 : i32
      %106 = tpu.memref_slice %arg2[%105, %c0_i32_92] : memref<64x128xf32, #tpu.memory_space<any>> -> memref<1x128xf32, #tpu.memory_space<any>>
      %c7_i32_93 = arith.constant 7 : i32
      %c0_i32_94 = arith.constant 0 : i32
      %107 = tpu.memref_slice %arg4[%c0_i32_89, %c7_i32_93, %c0_i32_94] : memref<2x8x128xf32, #tpu.memory_space<vmem>> -> memref<1x1x128xf32, #tpu.memory_space<vmem>>
      %108 = tpu.memref_squeeze %107 : memref<1x1x128xf32, #tpu.memory_space<vmem>> -> memref<1x128xf32, #tpu.memory_space<vmem>>
      %109 = tpu.memref_slice %arg5[%c0_i32_90, %c7_i32_91] : memref<2x8x!tpu.dma_semaphore, #tpu.memory_space<semaphore_mem>> -> memref<1x1x!tpu.dma_semaphore, #tpu.memory_space<semaphore_mem>>
      %110 = tpu.memref_squeeze %109 : memref<1x1x!tpu.dma_semaphore, #tpu.memory_space<semaphore_mem>> -> memref<!tpu.dma_semaphore, #tpu.memory_space<semaphore_mem>>
      tpu.enqueue_dma source(%106 : memref<1x128xf32, #tpu.memory_space<any>>) target(%108 : memref<1x128xf32, #tpu.memory_space<vmem>>) target_semaphore(%110 : memref<!tpu.dma_semaphore, #tpu.memory_space<semaphore_mem>>)
    } else {
    }
    %c1_i32_5 = arith.constant 1 : i32
    %13 = arith.addi %arg0, %c1_i32_5 : i32
    %c2_i32_6 = arith.constant 2 : i32
    %14 = arith.cmpi slt, %13, %c2_i32_6 : i32
    %15 = arith.extui %14 : i1 to i32
    %c0_i32_7 = arith.constant 0 : i32
    %16 = arith.cmpi ne, %15, %c0_i32_7 : i32
    scf.if %16 {
      %c1_i32_46 = arith.constant 1 : i32
      %63 = arith.addi %arg0, %c1_i32_46 : i32
      %c1_i32_47 = arith.constant 1 : i32
      %64 = arith.subi %c1_i32_47, %9 : i32
      %c8_i32 = arith.constant 8 : i32
      %65 = arith.muli %63, %c8_i32 : i32
      %c0_i32_48 = arith.constant 0 : i32
      %66 = arith.addi %65, %c0_i32_48 : i32
      %67 = arith.index_cast %66 : i32 to index
      %68 = memref.load %arg1[%67] : memref<16xi32, #tpu.memory_space<smem>>
      %c0_i32_49 = arith.constant 0 : i32
      %c0_i32_50 = arith.constant 0 : i32
      %69 = tpu.memref_slice %arg2[%68, %c0_i32_50] : memref<64x128xf32, #tpu.memory_space<any>> -> memref<1x128xf32, #tpu.memory_space<any>>
      %c0_i32_51 = arith.constant 0 : i32
      %c0_i32_52 = arith.constant 0 : i32
      %70 = tpu.memref_slice %arg4[%64, %c0_i32_51, %c0_i32_52] : memref<2x8x128xf32, #tpu.memory_space<vmem>> -> memref<1x1x128xf32, #tpu.memory_space<vmem>>
      %71 = tpu.memref_squeeze %70 : memref<1x1x128xf32, #tpu.memory_space<vmem>> -> memref<1x128xf32, #tpu.memory_space<vmem>>
      %72 = tpu.memref_slice %arg5[%64, %c0_i32_49] : memref<2x8x!tpu.dma_semaphore, #tpu.memory_space<semaphore_mem>> -> memref<1x1x!tpu.dma_semaphore, #tpu.memory_space<semaphore_mem>>
      %73 = tpu.memref_squeeze %72 : memref<1x1x!tpu.dma_semaphore, #tpu.memory_space<semaphore_mem>> -> memref<!tpu.dma_semaphore, #tpu.memory_space<semaphore_mem>>
      tpu.enqueue_dma source(%69 : memref<1x128xf32, #tpu.memory_space<any>>) target(%71 : memref<1x128xf32, #tpu.memory_space<vmem>>) target_semaphore(%73 : memref<!tpu.dma_semaphore, #tpu.memory_space<semaphore_mem>>)
      %c1_i32_53 = arith.constant 1 : i32
      %74 = arith.addi %65, %c1_i32_53 : i32
      %75 = arith.index_cast %74 : i32 to index
      %76 = memref.load %arg1[%75] : memref<16xi32, #tpu.memory_space<smem>>
      %c1_i32_54 = arith.constant 1 : i32
      %c0_i32_55 = arith.constant 0 : i32
      %77 = tpu.memref_slice %arg2[%76, %c0_i32_55] : memref<64x128xf32, #tpu.memory_space<any>> -> memref<1x128xf32, #tpu.memory_space<any>>
      %c1_i32_56 = arith.constant 1 : i32
      %c0_i32_57 = arith.constant 0 : i32
      %78 = tpu.memref_slice %arg4[%64, %c1_i32_56, %c0_i32_57] : memref<2x8x128xf32, #tpu.memory_space<vmem>> -> memref<1x1x128xf32, #tpu.memory_space<vmem>>
      %79 = tpu.memref_squeeze %78 : memref<1x1x128xf32, #tpu.memory_space<vmem>> -> memref<1x128xf32, #tpu.memory_space<vmem>>
      %80 = tpu.memref_slice %arg5[%64, %c1_i32_54] : memref<2x8x!tpu.dma_semaphore, #tpu.memory_space<semaphore_mem>> -> memref<1x1x!tpu.dma_semaphore, #tpu.memory_space<semaphore_mem>>
      %81 = tpu.memref_squeeze %80 : memref<1x1x!tpu.dma_semaphore, #tpu.memory_space<semaphore_mem>> -> memref<!tpu.dma_semaphore, #tpu.memory_space<semaphore_mem>>
      tpu.enqueue_dma source(%77 : memref<1x128xf32, #tpu.memory_space<any>>) target(%79 : memref<1x128xf32, #tpu.memory_space<vmem>>) target_semaphore(%81 : memref<!tpu.dma_semaphore, #tpu.memory_space<semaphore_mem>>)
      %c2_i32_58 = arith.constant 2 : i32
      %82 = arith.addi %65, %c2_i32_58 : i32
      %83 = arith.index_cast %82 : i32 to index
      %84 = memref.load %arg1[%83] : memref<16xi32, #tpu.memory_space<smem>>
      %c2_i32_59 = arith.constant 2 : i32
      %c0_i32_60 = arith.constant 0 : i32
      %85 = tpu.memref_slice %arg2[%84, %c0_i32_60] : memref<64x128xf32, #tpu.memory_space<any>> -> memref<1x128xf32, #tpu.memory_space<any>>
      %c2_i32_61 = arith.constant 2 : i32
      %c0_i32_62 = arith.constant 0 : i32
      %86 = tpu.memref_slice %arg4[%64, %c2_i32_61, %c0_i32_62] : memref<2x8x128xf32, #tpu.memory_space<vmem>> -> memref<1x1x128xf32, #tpu.memory_space<vmem>>
      %87 = tpu.memref_squeeze %86 : memref<1x1x128xf32, #tpu.memory_space<vmem>> -> memref<1x128xf32, #tpu.memory_space<vmem>>
      %88 = tpu.memref_slice %arg5[%64, %c2_i32_59] : memref<2x8x!tpu.dma_semaphore, #tpu.memory_space<semaphore_mem>> -> memref<1x1x!tpu.dma_semaphore, #tpu.memory_space<semaphore_mem>>
      %89 = tpu.memref_squeeze %88 : memref<1x1x!tpu.dma_semaphore, #tpu.memory_space<semaphore_mem>> -> memref<!tpu.dma_semaphore, #tpu.memory_space<semaphore_mem>>
      tpu.enqueue_dma source(%85 : memref<1x128xf32, #tpu.memory_space<any>>) target(%87 : memref<1x128xf32, #tpu.memory_space<vmem>>) target_semaphore(%89 : memref<!tpu.dma_semaphore, #tpu.memory_space<semaphore_mem>>)
      %c3_i32_63 = arith.constant 3 : i32
      %90 = arith.addi %65, %c3_i32_63 : i32
      %91 = arith.index_cast %90 : i32 to index
      %92 = memref.load %arg1[%91] : memref<16xi32, #tpu.memory_space<smem>>
      %c3_i32_64 = arith.constant 3 : i32
      %c0_i32_65 = arith.constant 0 : i32
      %93 = tpu.memref_slice %arg2[%92, %c0_i32_65] : memref<64x128xf32, #tpu.memory_space<any>> -> memref<1x128xf32, #tpu.memory_space<any>>
      %c3_i32_66 = arith.constant 3 : i32
      %c0_i32_67 = arith.constant 0 : i32
      %94 = tpu.memref_slice %arg4[%64, %c3_i32_66, %c0_i32_67] : memref<2x8x128xf32, #tpu.memory_space<vmem>> -> memref<1x1x128xf32, #tpu.memory_space<vmem>>
      %95 = tpu.memref_squeeze %94 : memref<1x1x128xf32, #tpu.memory_space<vmem>> -> memref<1x128xf32, #tpu.memory_space<vmem>>
      %96 = tpu.memref_slice %arg5[%64, %c3_i32_64] : memref<2x8x!tpu.dma_semaphore, #tpu.memory_space<semaphore_mem>> -> memref<1x1x!tpu.dma_semaphore, #tpu.memory_space<semaphore_mem>>
      %97 = tpu.memref_squeeze %96 : memref<1x1x!tpu.dma_semaphore, #tpu.memory_space<semaphore_mem>> -> memref<!tpu.dma_semaphore, #tpu.memory_space<semaphore_mem>>
      tpu.enqueue_dma source(%93 : memref<1x128xf32, #tpu.memory_space<any>>) target(%95 : memref<1x128xf32, #tpu.memory_space<vmem>>) target_semaphore(%97 : memref<!tpu.dma_semaphore, #tpu.memory_space<semaphore_mem>>)
      %c4_i32_68 = arith.constant 4 : i32
      %98 = arith.addi %65, %c4_i32_68 : i32
      %99 = arith.index_cast %98 : i32 to index
      %100 = memref.load %arg1[%99] : memref<16xi32, #tpu.memory_space<smem>>
      %c4_i32_69 = arith.constant 4 : i32
      %c0_i32_70 = arith.constant 0 : i32
      %101 = tpu.memref_slice %arg2[%100, %c0_i32_70] : memref<64x128xf32, #tpu.memory_space<any>> -> memref<1x128xf32, #tpu.memory_space<any>>
      %c4_i32_71 = arith.constant 4 : i32
      %c0_i32_72 = arith.constant 0 : i32
      %102 = tpu.memref_slice %arg4[%64, %c4_i32_71, %c0_i32_72] : memref<2x8x128xf32, #tpu.memory_space<vmem>> -> memref<1x1x128xf32, #tpu.memory_space<vmem>>
      %103 = tpu.memref_squeeze %102 : memref<1x1x128xf32, #tpu.memory_space<vmem>> -> memref<1x128xf32, #tpu.memory_space<vmem>>
      %104 = tpu.memref_slice %arg5[%64, %c4_i32_69] : memref<2x8x!tpu.dma_semaphore, #tpu.memory_space<semaphore_mem>> -> memref<1x1x!tpu.dma_semaphore, #tpu.memory_space<semaphore_mem>>
      %105 = tpu.memref_squeeze %104 : memref<1x1x!tpu.dma_semaphore, #tpu.memory_space<semaphore_mem>> -> memref<!tpu.dma_semaphore, #tpu.memory_space<semaphore_mem>>
      tpu.enqueue_dma source(%101 : memref<1x128xf32, #tpu.memory_space<any>>) target(%103 : memref<1x128xf32, #tpu.memory_space<vmem>>) target_semaphore(%105 : memref<!tpu.dma_semaphore, #tpu.memory_space<semaphore_mem>>)
      %c5_i32_73 = arith.constant 5 : i32
      %106 = arith.addi %65, %c5_i32_73 : i32
      %107 = arith.index_cast %106 : i32 to index
      %108 = memref.load %arg1[%107] : memref<16xi32, #tpu.memory_space<smem>>
      %c5_i32_74 = arith.constant 5 : i32
      %c0_i32_75 = arith.constant 0 : i32
      %109 = tpu.memref_slice %arg2[%108, %c0_i32_75] : memref<64x128xf32, #tpu.memory_space<any>> -> memref<1x128xf32, #tpu.memory_space<any>>
      %c5_i32_76 = arith.constant 5 : i32
      %c0_i32_77 = arith.constant 0 : i32
      %110 = tpu.memref_slice %arg4[%64, %c5_i32_76, %c0_i32_77] : memref<2x8x128xf32, #tpu.memory_space<vmem>> -> memref<1x1x128xf32, #tpu.memory_space<vmem>>
      %111 = tpu.memref_squeeze %110 : memref<1x1x128xf32, #tpu.memory_space<vmem>> -> memref<1x128xf32, #tpu.memory_space<vmem>>
      %112 = tpu.memref_slice %arg5[%64, %c5_i32_74] : memref<2x8x!tpu.dma_semaphore, #tpu.memory_space<semaphore_mem>> -> memref<1x1x!tpu.dma_semaphore, #tpu.memory_space<semaphore_mem>>
      %113 = tpu.memref_squeeze %112 : memref<1x1x!tpu.dma_semaphore, #tpu.memory_space<semaphore_mem>> -> memref<!tpu.dma_semaphore, #tpu.memory_space<semaphore_mem>>
      tpu.enqueue_dma source(%109 : memref<1x128xf32, #tpu.memory_space<any>>) target(%111 : memref<1x128xf32, #tpu.memory_space<vmem>>) target_semaphore(%113 : memref<!tpu.dma_semaphore, #tpu.memory_space<semaphore_mem>>)
      %c6_i32_78 = arith.constant 6 : i32
      %114 = arith.addi %65, %c6_i32_78 : i32
      %115 = arith.index_cast %114 : i32 to index
      %116 = memref.load %arg1[%115] : memref<16xi32, #tpu.memory_space<smem>>
      %c6_i32_79 = arith.constant 6 : i32
      %c0_i32_80 = arith.constant 0 : i32
      %117 = tpu.memref_slice %arg2[%116, %c0_i32_80] : memref<64x128xf32, #tpu.memory_space<any>> -> memref<1x128xf32, #tpu.memory_space<any>>
      %c6_i32_81 = arith.constant 6 : i32
      %c0_i32_82 = arith.constant 0 : i32
      %118 = tpu.memref_slice %arg4[%64, %c6_i32_81, %c0_i32_82] : memref<2x8x128xf32, #tpu.memory_space<vmem>> -> memref<1x1x128xf32, #tpu.memory_space<vmem>>
      %119 = tpu.memref_squeeze %118 : memref<1x1x128xf32, #tpu.memory_space<vmem>> -> memref<1x128xf32, #tpu.memory_space<vmem>>
      %120 = tpu.memref_slice %arg5[%64, %c6_i32_79] : memref<2x8x!tpu.dma_semaphore, #tpu.memory_space<semaphore_mem>> -> memref<1x1x!tpu.dma_semaphore, #tpu.memory_space<semaphore_mem>>
      %121 = tpu.memref_squeeze %120 : memref<1x1x!tpu.dma_semaphore, #tpu.memory_space<semaphore_mem>> -> memref<!tpu.dma_semaphore, #tpu.memory_space<semaphore_mem>>
      tpu.enqueue_dma source(%117 : memref<1x128xf32, #tpu.memory_space<any>>) target(%119 : memref<1x128xf32, #tpu.memory_space<vmem>>) target_semaphore(%121 : memref<!tpu.dma_semaphore, #tpu.memory_space<semaphore_mem>>)
      %c7_i32_83 = arith.constant 7 : i32
      %122 = arith.addi %65, %c7_i32_83 : i32
      %123 = arith.index_cast %122 : i32 to index
      %124 = memref.load %arg1[%123] : memref<16xi32, #tpu.memory_space<smem>>
      %c7_i32_84 = arith.constant 7 : i32
      %c0_i32_85 = arith.constant 0 : i32
      %125 = tpu.memref_slice %arg2[%124, %c0_i32_85] : memref<64x128xf32, #tpu.memory_space<any>> -> memref<1x128xf32, #tpu.memory_space<any>>
      %c7_i32_86 = arith.constant 7 : i32
      %c0_i32_87 = arith.constant 0 : i32
      %126 = tpu.memref_slice %arg4[%64, %c7_i32_86, %c0_i32_87] : memref<2x8x128xf32, #tpu.memory_space<vmem>> -> memref<1x1x128xf32, #tpu.memory_space<vmem>>
      %127 = tpu.memref_squeeze %126 : memref<1x1x128xf32, #tpu.memory_space<vmem>> -> memref<1x128xf32, #tpu.memory_space<vmem>>
      %128 = tpu.memref_slice %arg5[%64, %c7_i32_84] : memref<2x8x!tpu.dma_semaphore, #tpu.memory_space<semaphore_mem>> -> memref<1x1x!tpu.dma_semaphore, #tpu.memory_space<semaphore_mem>>
      %129 = tpu.memref_squeeze %128 : memref<1x1x!tpu.dma_semaphore, #tpu.memory_space<semaphore_mem>> -> memref<!tpu.dma_semaphore, #tpu.memory_space<semaphore_mem>>
      tpu.enqueue_dma source(%125 : memref<1x128xf32, #tpu.memory_space<any>>) target(%127 : memref<1x128xf32, #tpu.memory_space<vmem>>) target_semaphore(%129 : memref<!tpu.dma_semaphore, #tpu.memory_space<semaphore_mem>>)
    } else {
    }
    %c0_i32_8 = arith.constant 0 : i32
    %c0_i32_9 = arith.constant 0 : i32
    %c0_i32_10 = arith.constant 0 : i32
    %17 = tpu.memref_slice %arg2[%c0_i32_9, %c0_i32_10] : memref<64x128xf32, #tpu.memory_space<any>> -> memref<1x128xf32, #tpu.memory_space<any>>
    %c0_i32_11 = arith.constant 0 : i32
    %c0_i32_12 = arith.constant 0 : i32
    %18 = tpu.memref_slice %arg4[%9, %c0_i32_11, %c0_i32_12] : memref<2x8x128xf32, #tpu.memory_space<vmem>> -> memref<1x1x128xf32, #tpu.memory_space<vmem>>
    %19 = tpu.memref_squeeze %18 : memref<1x1x128xf32, #tpu.memory_space<vmem>> -> memref<1x128xf32, #tpu.memory_space<vmem>>
    %20 = tpu.memref_slice %arg5[%9, %c0_i32_8] : memref<2x8x!tpu.dma_semaphore, #tpu.memory_space<semaphore_mem>> -> memref<1x1x!tpu.dma_semaphore, #tpu.memory_space<semaphore_mem>>
    %21 = tpu.memref_squeeze %20 : memref<1x1x!tpu.dma_semaphore, #tpu.memory_space<semaphore_mem>> -> memref<!tpu.dma_semaphore, #tpu.memory_space<semaphore_mem>>
    tpu.wait_dma2 semaphore(%21 : memref<!tpu.dma_semaphore, #tpu.memory_space<semaphore_mem>>) src(%17 : memref<1x128xf32, #tpu.memory_space<any>>) dst(%19 : memref<1x128xf32, #tpu.memory_space<vmem>>)
    %c1_i32_13 = arith.constant 1 : i32
    %c0_i32_14 = arith.constant 0 : i32
    %c0_i32_15 = arith.constant 0 : i32
    %22 = tpu.memref_slice %arg2[%c0_i32_14, %c0_i32_15] : memref<64x128xf32, #tpu.memory_space<any>> -> memref<1x128xf32, #tpu.memory_space<any>>
    %c1_i32_16 = arith.constant 1 : i32
    %c0_i32_17 = arith.constant 0 : i32
    %23 = tpu.memref_slice %arg4[%9, %c1_i32_16, %c0_i32_17] : memref<2x8x128xf32, #tpu.memory_space<vmem>> -> memref<1x1x128xf32, #tpu.memory_space<vmem>>
    %24 = tpu.memref_squeeze %23 : memref<1x1x128xf32, #tpu.memory_space<vmem>> -> memref<1x128xf32, #tpu.memory_space<vmem>>
    %25 = tpu.memref_slice %arg5[%9, %c1_i32_13] : memref<2x8x!tpu.dma_semaphore, #tpu.memory_space<semaphore_mem>> -> memref<1x1x!tpu.dma_semaphore, #tpu.memory_space<semaphore_mem>>
    %26 = tpu.memref_squeeze %25 : memref<1x1x!tpu.dma_semaphore, #tpu.memory_space<semaphore_mem>> -> memref<!tpu.dma_semaphore, #tpu.memory_space<semaphore_mem>>
    tpu.wait_dma2 semaphore(%26 : memref<!tpu.dma_semaphore, #tpu.memory_space<semaphore_mem>>) src(%22 : memref<1x128xf32, #tpu.memory_space<any>>) dst(%24 : memref<1x128xf32, #tpu.memory_space<vmem>>)
    %c2_i32_18 = arith.constant 2 : i32
    %c0_i32_19 = arith.constant 0 : i32
    %c0_i32_20 = arith.constant 0 : i32
    %27 = tpu.memref_slice %arg2[%c0_i32_19, %c0_i32_20] : memref<64x128xf32, #tpu.memory_space<any>> -> memref<1x128xf32, #tpu.memory_space<any>>
    %c2_i32_21 = arith.constant 2 : i32
    %c0_i32_22 = arith.constant 0 : i32
    %28 = tpu.memref_slice %arg4[%9, %c2_i32_21, %c0_i32_22] : memref<2x8x128xf32, #tpu.memory_space<vmem>> -> memref<1x1x128xf32, #tpu.memory_space<vmem>>
    %29 = tpu.memref_squeeze %28 : memref<1x1x128xf32, #tpu.memory_space<vmem>> -> memref<1x128xf32, #tpu.memory_space<vmem>>
    %30 = tpu.memref_slice %arg5[%9, %c2_i32_18] : memref<2x8x!tpu.dma_semaphore, #tpu.memory_space<semaphore_mem>> -> memref<1x1x!tpu.dma_semaphore, #tpu.memory_space<semaphore_mem>>
    %31 = tpu.memref_squeeze %30 : memref<1x1x!tpu.dma_semaphore, #tpu.memory_space<semaphore_mem>> -> memref<!tpu.dma_semaphore, #tpu.memory_space<semaphore_mem>>
    tpu.wait_dma2 semaphore(%31 : memref<!tpu.dma_semaphore, #tpu.memory_space<semaphore_mem>>) src(%27 : memref<1x128xf32, #tpu.memory_space<any>>) dst(%29 : memref<1x128xf32, #tpu.memory_space<vmem>>)
    %c3_i32 = arith.constant 3 : i32
    %c0_i32_23 = arith.constant 0 : i32
    %c0_i32_24 = arith.constant 0 : i32
    %32 = tpu.memref_slice %arg2[%c0_i32_23, %c0_i32_24] : memref<64x128xf32, #tpu.memory_space<any>> -> memref<1x128xf32, #tpu.memory_space<any>>
    %c3_i32_25 = arith.constant 3 : i32
    %c0_i32_26 = arith.constant 0 : i32
    %33 = tpu.memref_slice %arg4[%9, %c3_i32_25, %c0_i32_26] : memref<2x8x128xf32, #tpu.memory_space<vmem>> -> memref<1x1x128xf32, #tpu.memory_space<vmem>>
    %34 = tpu.memref_squeeze %33 : memref<1x1x128xf32, #tpu.memory_space<vmem>> -> memref<1x128xf32, #tpu.memory_space<vmem>>
    %35 = tpu.memref_slice %arg5[%9, %c3_i32] : memref<2x8x!tpu.dma_semaphore, #tpu.memory_space<semaphore_mem>> -> memref<1x1x!tpu.dma_semaphore, #tpu.memory_space<semaphore_mem>>
    %36 = tpu.memref_squeeze %35 : memref<1x1x!tpu.dma_semaphore, #tpu.memory_space<semaphore_mem>> -> memref<!tpu.dma_semaphore, #tpu.memory_space<semaphore_mem>>
    tpu.wait_dma2 semaphore(%36 : memref<!tpu.dma_semaphore, #tpu.memory_space<semaphore_mem>>) src(%32 : memref<1x128xf32, #tpu.memory_space<any>>) dst(%34 : memref<1x128xf32, #tpu.memory_space<vmem>>)
    %c4_i32 = arith.constant 4 : i32
    %c0_i32_27 = arith.constant 0 : i32
    %c0_i32_28 = arith.constant 0 : i32
    %37 = tpu.memref_slice %arg2[%c0_i32_27, %c0_i32_28] : memref<64x128xf32, #tpu.memory_space<any>> -> memref<1x128xf32, #tpu.memory_space<any>>
    %c4_i32_29 = arith.constant 4 : i32
    %c0_i32_30 = arith.constant 0 : i32
    %38 = tpu.memref_slice %arg4[%9, %c4_i32_29, %c0_i32_30] : memref<2x8x128xf32, #tpu.memory_space<vmem>> -> memref<1x1x128xf32, #tpu.memory_space<vmem>>
    %39 = tpu.memref_squeeze %38 : memref<1x1x128xf32, #tpu.memory_space<vmem>> -> memref<1x128xf32, #tpu.memory_space<vmem>>
    %40 = tpu.memref_slice %arg5[%9, %c4_i32] : memref<2x8x!tpu.dma_semaphore, #tpu.memory_space<semaphore_mem>> -> memref<1x1x!tpu.dma_semaphore, #tpu.memory_space<semaphore_mem>>
    %41 = tpu.memref_squeeze %40 : memref<1x1x!tpu.dma_semaphore, #tpu.memory_space<semaphore_mem>> -> memref<!tpu.dma_semaphore, #tpu.memory_space<semaphore_mem>>
    tpu.wait_dma2 semaphore(%41 : memref<!tpu.dma_semaphore, #tpu.memory_space<semaphore_mem>>) src(%37 : memref<1x128xf32, #tpu.memory_space<any>>) dst(%39 : memref<1x128xf32, #tpu.memory_space<vmem>>)
    %c5_i32 = arith.constant 5 : i32
    %c0_i32_31 = arith.constant 0 : i32
    %c0_i32_32 = arith.constant 0 : i32
    %42 = tpu.memref_slice %arg2[%c0_i32_31, %c0_i32_32] : memref<64x128xf32, #tpu.memory_space<any>> -> memref<1x128xf32, #tpu.memory_space<any>>
    %c5_i32_33 = arith.constant 5 : i32
    %c0_i32_34 = arith.constant 0 : i32
    %43 = tpu.memref_slice %arg4[%9, %c5_i32_33, %c0_i32_34] : memref<2x8x128xf32, #tpu.memory_space<vmem>> -> memref<1x1x128xf32, #tpu.memory_space<vmem>>
    %44 = tpu.memref_squeeze %43 : memref<1x1x128xf32, #tpu.memory_space<vmem>> -> memref<1x128xf32, #tpu.memory_space<vmem>>
    %45 = tpu.memref_slice %arg5[%9, %c5_i32] : memref<2x8x!tpu.dma_semaphore, #tpu.memory_space<semaphore_mem>> -> memref<1x1x!tpu.dma_semaphore, #tpu.memory_space<semaphore_mem>>
    %46 = tpu.memref_squeeze %45 : memref<1x1x!tpu.dma_semaphore, #tpu.memory_space<semaphore_mem>> -> memref<!tpu.dma_semaphore, #tpu.memory_space<semaphore_mem>>
    tpu.wait_dma2 semaphore(%46 : memref<!tpu.dma_semaphore, #tpu.memory_space<semaphore_mem>>) src(%42 : memref<1x128xf32, #tpu.memory_space<any>>) dst(%44 : memref<1x128xf32, #tpu.memory_space<vmem>>)
    %c6_i32 = arith.constant 6 : i32
    %c0_i32_35 = arith.constant 0 : i32
    %c0_i32_36 = arith.constant 0 : i32
    %47 = tpu.memref_slice %arg2[%c0_i32_35, %c0_i32_36] : memref<64x128xf32, #tpu.memory_space<any>> -> memref<1x128xf32, #tpu.memory_space<any>>
    %c6_i32_37 = arith.constant 6 : i32
    %c0_i32_38 = arith.constant 0 : i32
    %48 = tpu.memref_slice %arg4[%9, %c6_i32_37, %c0_i32_38] : memref<2x8x128xf32, #tpu.memory_space<vmem>> -> memref<1x1x128xf32, #tpu.memory_space<vmem>>
    %49 = tpu.memref_squeeze %48 : memref<1x1x128xf32, #tpu.memory_space<vmem>> -> memref<1x128xf32, #tpu.memory_space<vmem>>
    %50 = tpu.memref_slice %arg5[%9, %c6_i32] : memref<2x8x!tpu.dma_semaphore, #tpu.memory_space<semaphore_mem>> -> memref<1x1x!tpu.dma_semaphore, #tpu.memory_space<semaphore_mem>>
    %51 = tpu.memref_squeeze %50 : memref<1x1x!tpu.dma_semaphore, #tpu.memory_space<semaphore_mem>> -> memref<!tpu.dma_semaphore, #tpu.memory_space<semaphore_mem>>
    tpu.wait_dma2 semaphore(%51 : memref<!tpu.dma_semaphore, #tpu.memory_space<semaphore_mem>>) src(%47 : memref<1x128xf32, #tpu.memory_space<any>>) dst(%49 : memref<1x128xf32, #tpu.memory_space<vmem>>)
    %c7_i32 = arith.constant 7 : i32
    %c0_i32_39 = arith.constant 0 : i32
    %c0_i32_40 = arith.constant 0 : i32
    %52 = tpu.memref_slice %arg2[%c0_i32_39, %c0_i32_40] : memref<64x128xf32, #tpu.memory_space<any>> -> memref<1x128xf32, #tpu.memory_space<any>>
    %c7_i32_41 = arith.constant 7 : i32
    %c0_i32_42 = arith.constant 0 : i32
    %53 = tpu.memref_slice %arg4[%9, %c7_i32_41, %c0_i32_42] : memref<2x8x128xf32, #tpu.memory_space<vmem>> -> memref<1x1x128xf32, #tpu.memory_space<vmem>>
    %54 = tpu.memref_squeeze %53 : memref<1x1x128xf32, #tpu.memory_space<vmem>> -> memref<1x128xf32, #tpu.memory_space<vmem>>
    %55 = tpu.memref_slice %arg5[%9, %c7_i32] : memref<2x8x!tpu.dma_semaphore, #tpu.memory_space<semaphore_mem>> -> memref<1x1x!tpu.dma_semaphore, #tpu.memory_space<semaphore_mem>>
    %56 = tpu.memref_squeeze %55 : memref<1x1x!tpu.dma_semaphore, #tpu.memory_space<semaphore_mem>> -> memref<!tpu.dma_semaphore, #tpu.memory_space<semaphore_mem>>
    tpu.wait_dma2 semaphore(%56 : memref<!tpu.dma_semaphore, #tpu.memory_space<semaphore_mem>>) src(%52 : memref<1x128xf32, #tpu.memory_space<any>>) dst(%54 : memref<1x128xf32, #tpu.memory_space<vmem>>)
    %57 = arith.index_cast %9 : i32 to index
    %c0 = arith.constant 0 : index
    %c0_43 = arith.constant 0 : index
    %58 = vector.load %arg4[%57, %c0, %c0_43] : memref<2x8x128xf32, #tpu.memory_space<vmem>>, vector<1x8x128xf32>
    %59 = vector.shape_cast %58 : vector<1x8x128xf32> to vector<8x128xf32>
    %cst = arith.constant 11.3137083 : f32
    %60 = vector.broadcast %cst : f32 to vector<8x128xf32>
    %61 = arith.mulf %59, %60 : vector<8x128xf32>
    %c0_44 = arith.constant 0 : index
    %c0_45 = arith.constant 0 : index
    %62 = vector.load %arg3[%c0_44, %c0_45] : memref<8x128xf32, #tpu.memory_space<vmem>>, vector<8x128xf32>
    tpu.vector_store %arg3[%c0_44, %c0_45], %61 {strides = array<i32>} : memref<8x128xf32, #tpu.memory_space<vmem>>, vector<8x128xf32>,
    return
  }
  func.func @transform_1(%arg0: i32, %arg1: memref<16xi32, #tpu.memory_space<smem>>) -> (i32, i32) {
    %c0_i32 = arith.constant 0 : i32
    %c0_i32_0 = arith.constant 0 : i32
    return %arg0, %c0_i32 : i32, i32
  }
}

</mosaic_0001>

<llo_original>
// kernel: tpu_custom_call.1
$region0: #{tpu_custom_call.1}
  #allocation0 [shape = 'u32[]', space=smem, size = 0x4, offset = 0x4, fixed_abs, tag = 'smem constant byte address 0x4 - core index']
  #allocation1 [shape = 'u32[144,128]{1,0:T(1,128)}', space=vmem, size = 0x12000, scoped, tag = 'internal scratch']
  #allocation2 [shape = 'f32[2,8,128]{2,1,0:T(8,128)}', space=vmem, size = 0x2000, scoped, tag = 'scratch operand']
  #allocation3 [shape = 's32[16]{0}', space=sflag, size = 0x40, scoped, tag = 'scratch operand']
  #allocation4 [shape = 's32[1]{0}', space=sflag, size = 0x4, scoped, tag = 'scoped memory for tpu_custom_call.1']
  #allocation5 [shape = 'u8[512]{0}', space=smem, size = 0x200, scoped, tag = 'prefetched SMEM operand 0']
  #allocation8 [shape = 's32[]', space=sflag, size = 0x4, offset = 0, fixed_abs, tag = 'sflag constant byte address 0x0 - dummy sync flag']
  #allocation9 [shape = 's32[]', space=sflag, size = 0x4, offset = 0, fixed_abs, tag = 'sflag constant byte address 0x0 - dummy sync flag']
  #allocation10 [shape = 'u32[]', space=smem, size = 0x4, offset = 0x44, fixed_abs, tag = 'smem constant byte address 0x44 - assertion arg 0']
  #allocation11 [shape = 'u32[]', space=smem, size = 0x4, offset = 0x48, fixed_abs, tag = 'smem constant byte address 0x48 - assertion arg 1']
  #allocation12 [shape = 's32[]', space=sflag, size = 0x4, offset = 0, fixed_abs, tag = 'sflag constant byte address 0x0 - dummy sync flag']
  #allocation13 [shape = 's32[]', space=sflag, size = 0x4, offset = 0, fixed_abs, tag = 'sflag constant byte address 0x0 - dummy sync flag']
  #allocation14 [shape = 's32[]', space=sflag, size = 0x4, offset = 0, fixed_abs, tag = 'sflag constant byte address 0x0 - dummy sync flag']
  #allocation15 [shape = 's32[]', space=sflag, size = 0x4, offset = 0, fixed_abs, tag = 'sflag constant byte address 0x0 - dummy sync flag']
  #allocation16 [shape = 's32[]', space=sflag, size = 0x4, offset = 0, fixed_abs, tag = 'sflag constant byte address 0x0 - dummy sync flag']
  #allocation17 [shape = 's32[]', space=sflag, size = 0x4, offset = 0, fixed_abs, tag = 'sflag constant byte address 0x0 - dummy sync flag']
  #allocation18 [shape = 's32[]', space=sflag, size = 0x4, offset = 0, fixed_abs, tag = 'sflag constant byte address 0x0 - dummy sync flag']
  #allocation19 [shape = 's32[]', space=sflag, size = 0x4, offset = 0, fixed_abs, tag = 'sflag constant byte address 0x0 - dummy sync flag']
  #allocation20 [shape = 's32[]', space=sflag, size = 0x4, offset = 0, fixed_abs, tag = 'sflag constant byte address 0x0 - dummy sync flag']
  #allocation21 [shape = 's32[]', space=sflag, size = 0x4, offset = 0, fixed_abs, tag = 'sflag constant byte address 0x0 - dummy sync flag']
  #allocation22 [shape = 's32[]', space=sflag, size = 0x4, offset = 0, fixed_abs, tag = 'sflag constant byte address 0x0 - dummy sync flag']
  #allocation23 [shape = 's32[]', space=sflag, size = 0x4, offset = 0, fixed_abs, tag = 'sflag constant byte address 0x0 - dummy sync flag']
  #allocation24 [shape = 's32[]', space=sflag, size = 0x4, offset = 0, fixed_abs, tag = 'sflag constant byte address 0x0 - dummy sync flag']
  #allocation25 [shape = 's32[]', space=sflag, size = 0x4, offset = 0, fixed_abs, tag = 'sflag constant byte address 0x0 - dummy sync flag']
  #allocation26 [shape = 's32[]', space=sflag, size = 0x4, offset = 0, fixed_abs, tag = 'sflag constant byte address 0x0 - dummy sync flag']
  #allocation27 [shape = 's32[]', space=sflag, size = 0x4, offset = 0, fixed_abs, tag = 'sflag constant byte address 0x0 - dummy sync flag']
  #allocation28 [shape = 's32[]', space=sflag, size = 0x4, offset = 0, fixed_abs, tag = 'sflag constant byte address 0x0 - dummy sync flag']
  #allocation29 [shape = 's32[]', space=sflag, size = 0x4, offset = 0, fixed_abs, tag = 'sflag constant byte address 0x0 - dummy sync flag']
  #allocation30 [shape = 's32[]', space=sflag, size = 0x4, offset = 0, fixed_abs, tag = 'sflag constant byte address 0x0 - dummy sync flag']
  #allocation31 [shape = 's32[]', space=sflag, size = 0x4, offset = 0, fixed_abs, tag = 'sflag constant byte address 0x0 - dummy sync flag']
  #allocation32 [shape = 's32[]', space=sflag, size = 0x4, offset = 0, fixed_abs, tag = 'sflag constant byte address 0x0 - dummy sync flag']
  #allocation33 [shape = 's32[]', space=sflag, size = 0x4, offset = 0, fixed_abs, tag = 'sflag constant byte address 0x0 - dummy sync flag']
  #allocation34 [shape = 's32[]', space=sflag, size = 0x4, offset = 0, fixed_abs, tag = 'sflag constant byte address 0x0 - dummy sync flag']
  #allocation35 [shape = 's32[]', space=sflag, size = 0x4, offset = 0, fixed_abs, tag = 'sflag constant byte address 0x0 - dummy sync flag']
  #allocation36 [shape = 's32[]', space=sflag, size = 0x4, offset = 0, fixed_abs, tag = 'sflag constant byte address 0x0 - dummy sync flag']
  #allocation37 [shape = 's32[]', space=sflag, size = 0x4, offset = 0, fixed_abs, tag = 'sflag constant byte address 0x0 - dummy sync flag']
  #allocation38 [shape = 's32[]', space=sflag, size = 0x4, offset = 0, fixed_abs, tag = 'sflag constant byte address 0x0 - dummy sync flag']
  #allocation39 [shape = 's32[]', space=sflag, size = 0x4, offset = 0, fixed_abs, tag = 'sflag constant byte address 0x0 - dummy sync flag']
  #allocation40 [shape = 's32[]', space=sflag, size = 0x4, offset = 0, fixed_abs, tag = 'sflag constant byte address 0x0 - dummy sync flag']
  #allocation41 [shape = 's32[]', space=sflag, size = 0x4, offset = 0, fixed_abs, tag = 'sflag constant byte address 0x0 - dummy sync flag']
  %s0 = inlined_call_operand.hbm [shape: s32[16], index: 0, kind: input, shape index: {}]
  %s1 = inlined_call_operand.hbm [shape: f32[64,128], index: 1, kind: input, shape index: {}]
  %s2 = inlined_call_operand.hbm [shape: f32[16,128], index: 2, kind: output, shape index: {}]
  %s3 = sld [smem:[#allocation0]]
  $region97: #{tpu_custom_call.1} parent=0
    _
  %s5 = ssub.s32 1, %s3
  %s6 = scalar_select 0, %s5, %s3
  %8 = dma.hbm_to_smem %s0, 16, [#allocation5], [#allocation4]
  %9 = dma.done [#allocation4], 16
  %10 = sfence
  $region1: #{tpu_custom_call.1} parent=0
    #allocation6 [shape = 'u8[8192]{0}', space=vmem, size = 0x2000, scoped, tag = 'output window, operand 0']
    #allocation7 [shape = 's32[2]{0}', space=sflag, size = 0x8, scoped, tag = 'scoped memory for tpu_custom_call.1']
    %11 = vsyncpa [#allocation7], 0
    %s12 = scalar_lea.sflag [#allocation7], 1
    %13 = vsyncpa %s12, 0
    loop: start=0, step=1, limit=3
    $region2: #{tpu_custom_call.1} parent=1 // loop_pre_header
      _
    $region3: #{tpu_custom_call.1} parent=1 // loop_header
      %s15 = sphi 0, %s19
      %p16 = scmp.ge.s32.totalorder %s15, 3
      %s24 = sphi 0, %s26
      %s27 = sphi 0, %s24
      %s37 = sphi 0, %s27
    $region4: #{tpu_custom_call.1} parent=1 // loop_header_branch
      %18 = sbr.rel (%p16) target = $region8
    $region5: #{tpu_custom_call.1} parent=1 // loop_body
      %s20 = ssub.s32 %s15, 1
      %s21 = sadd.s32 %s15, 1
      %s22 = ssub.s32 %s15, %s21
      %p23 = scmp.eq.s32.totalorder %s22, 0
      %s25 = sadd.s32 %s24, 1
      %s26 = scalar_select %p23, %s24, %s25
      %p28 = pneg %p23
      %p29 = scmp.eq.s32.totalorder %s15, 1
      %p30 = por %p28, %p29
      %p31 = scmp.ne.s32.totalorder %s24, %s27
      %p32 = scmp.eq.s32.totalorder %s15, 0
      %p33 = por %p31, %p32
      %p34 = scmp.ne.s32.totalorder %s24, %s27
      %p35 = scmp.eq.s32.totalorder %s20, 1
      %p36 = por %p34, %p35
      %p38 = scmp.ne.s32.totalorder %s27, %s37
      %p39 = scmp.eq.s32.totalorder %s20, 0
      %p40 = por %p38, %p39
      %p41 = scmp.lt.s32.totalorder %s15, 2
      // Predicated region
      $region9: #{tpu_custom_call.1} parent=5 // pred_check
        %p42 = pneg %p41
      $region10: #{tpu_custom_call.1} parent=5 // pred_check_branch
        %44 = sbr.rel (%p42) target = $region12
      $region11: #{tpu_custom_call.1} parent=5 // pred_region
        %p45 = pneg %p33
        %p46 = pneg %p30
        %s47 = sand.u32 %s24, 1
        %s48 = scalar_lea.sflag [#allocation7], %s47
        %s49 = sand.u32 %s24, 1
        %s50 = smul.addr %s49, 8
        %s51 = scalar_lea.vmem [#allocation6], %s50
        %p52 = scmp.lt.s32.totalorder %s15, 0
        %s53 = ssub.s32 0, %s15
        %s54 = scalar_select %p52, %s53, %s15
        %s55 = sand.u32 %s54, 1
        %s56 = ssub.s32 0, %s55
        %s57 = scalar_select %p52, %s56, %s55
        %p58 = scmp.ne.s32.totalorder %s57, 0
        %p59 = scmp.lt.s32.totalorder %s57, 0
        %p60 = pnand %p59, %p58
        %p61 = pneg %p60
        %s62 = sadd.s32 %s57, 2
        %s63 = scalar_select %p61, %s62, %s57
        %p64 = scmp.eq.s32.totalorder %s15, 0
        // Predicated region
        $region13: #{tpu_custom_call.1} parent=11 // pred_check
          %p65 = pneg %p64
        $region14: #{tpu_custom_call.1} parent=11 // pred_check_branch
          %67 = sbr.rel (%p65) target = $region16
        $region15: #{tpu_custom_call.1} parent=11 // pred_region
          %s68 = sld [smem:[#allocation5]]
          %s69 = smul.addr %s68, 16
          %s70 = scalar_lea.hbm %s1, %s69
          // Predicated region
          $region17: #{tpu_custom_call.1} parent=15 // pred_check
            _
          $region18: #{tpu_custom_call.1} parent=15 // pred_check_branch
            %72 = sbr.rel target = $region20
          $region19: #{tpu_custom_call.1} parent=15 // pred_region
            %73 = sst [smem:[#allocation10]] [#allocation9]
            %74 = sst [smem:[#allocation11]] [#allocation8]
          $region20: #{tpu_custom_call.1} parent=15 // pred_fallthru
            _
          %76 = shalt.err (0)
          %s78 = sshll.u32 [#allocation2], 4
          %s79 = int_to_ptr.vmem [resolvable:$true] %s78
          %81 = dma.hbm_to_vmem [thread:$0]  %s70, 16, %s79, [#allocation3]
          %s82 = sld [smem:[#allocation5 + $0x1]]
          %s83 = smul.addr %s82, 16
          %s84 = scalar_lea.hbm %s1, %s83
          %s85 = scalar_lea.vmem [#allocation2], 1
          %s86 = scalar_lea.sflag [#allocation3], 1
          // Predicated region
          $region21: #{tpu_custom_call.1} parent=15 // pred_check
            _
          $region22: #{tpu_custom_call.1} parent=15 // pred_check_branch
            %88 = sbr.rel target = $region24
          $region23: #{tpu_custom_call.1} parent=15 // pred_region
            %89 = sst [smem:[#allocation10]] [#allocation13]
            %90 = sst [smem:[#allocation11]] [#allocation12]
          $region24: #{tpu_custom_call.1} parent=15 // pred_fallthru
            _
          %92 = shalt.err (0)
          %s94 = sshll.u32 %s85, 4
          %s95 = int_to_ptr.vmem [resolvable:$true] %s94
          %97 = dma.hbm_to_vmem [thread:$0]  %s84, 16, %s95, %s86
          %s98 = sld [smem:[#allocation5 + $0x2]]
          %s99 = smul.addr %s98, 16
          %s100 = scalar_lea.hbm %s1, %s99
          %s101 = scalar_lea.vmem [#allocation2], 2
          %s102 = scalar_lea.sflag [#allocation3], 2
          // Predicated region
          $region25: #{tpu_custom_call.1} parent=15 // pred_check
            _
          $region26: #{tpu_custom_call.1} parent=15 // pred_check_branch
            %104 = sbr.rel target = $region28
          $region27: #{tpu_custom_call.1} parent=15 // pred_region
            %105 = sst [smem:[#allocation10]] [#allocation15]
            %106 = sst [smem:[#allocation11]] [#allocation14]
          $region28: #{tpu_custom_call.1} parent=15 // pred_fallthru
            _
          %108 = shalt.err (0)
          %s110 = sshll.u32 %s101, 4
          %s111 = int_to_ptr.vmem [resolvable:$true] %s110
          %113 = dma.hbm_to_vmem [thread:$0]  %s100, 16, %s111, %s102
          %s114 = sld [smem:[#allocation5 + $0x3]]
          %s115 = smul.addr %s114, 16
          %s116 = scalar_lea.hbm %s1, %s115
          %s117 = scalar_lea.vmem [#allocation2], 3
          %s118 = scalar_lea.sflag [#allocation3], 3
          // Predicated region
          $region29: #{tpu_custom_call.1} parent=15 // pred_check
            _
          $region30: #{tpu_custom_call.1} parent=15 // pred_check_branch
            %120 = sbr.rel target = $region32
          $region31: #{tpu_custom_call.1} parent=15 // pred_region
            %121 = sst [smem:[#allocation10]] [#allocation17]
            %122 = sst [smem:[#allocation11]] [#allocation16]
          $region32: #{tpu_custom_call.1} parent=15 // pred_fallthru
            _
          %124 = shalt.err (0)
          %s126 = sshll.u32 %s117, 4
          %s127 = int_to_ptr.vmem [resolvable:$true] %s126
          %129 = dma.hbm_to_vmem [thread:$0]  %s116, 16, %s127, %s118
          %s130 = sld [smem:[#allocation5 + $0x4]]
          %s131 = smul.addr %s130, 16
          %s132 = scalar_lea.hbm %s1, %s131
          %s133 = scalar_lea.vmem [#allocation2], 4
          %s134 = scalar_lea.sflag [#allocation3], 4
          // Predicated region
          $region33: #{tpu_custom_call.1} parent=15 // pred_check
            _
          $region34: #{tpu_custom_call.1} parent=15 // pred_check_branch
            %136 = sbr.rel target = $region36
          $region35: #{tpu_custom_call.1} parent=15 // pred_region
            %137 = sst [smem:[#allocation10]] [#allocation19]
            %138 = sst [smem:[#allocation11]] [#allocation18]
          $region36: #{tpu_custom_call.1} parent=15 // pred_fallthru
            _
          %140 = shalt.err (0)
          %s142 = sshll.u32 %s133, 4
          %s143 = int_to_ptr.vmem [resolvable:$true] %s142
          %145 = dma.hbm_to_vmem [thread:$0]  %s132, 16, %s143, %s134
          %s146 = sld [smem:[#allocation5 + $0x5]]
          %s147 = smul.addr %s146, 16
          %s148 = scalar_lea.hbm %s1, %s147
          %s149 = scalar_lea.vmem [#allocation2], 5
          %s150 = scalar_lea.sflag [#allocation3], 5
          // Predicated region
          $region37: #{tpu_custom_call.1} parent=15 // pred_check
            _
          $region38: #{tpu_custom_call.1} parent=15 // pred_check_branch
            %152 = sbr.rel target = $region40
          $region39: #{tpu_custom_call.1} parent=15 // pred_region
            %153 = sst [smem:[#allocation10]] [#allocation21]
            %154 = sst [smem:[#allocation11]] [#allocation20]
          $region40: #{tpu_custom_call.1} parent=15 // pred_fallthru
            _
          %156 = shalt.err (0)
          %s158 = sshll.u32 %s149, 4
          %s159 = int_to_ptr.vmem [resolvable:$true] %s158
          %161 = dma.hbm_to_vmem [thread:$0]  %s148, 16, %s159, %s150
          %s162 = sld [smem:[#allocation5 + $0x6]]
          %s163 = smul.addr %s162, 16
          %s164 = scalar_lea.hbm %s1, %s163
          %s165 = scalar_lea.vmem [#allocation2], 6
          %s166 = scalar_lea.sflag [#allocation3], 6
          // Predicated region
          $region41: #{tpu_custom_call.1} parent=15 // pred_check
            _
          $region42: #{tpu_custom_call.1} parent=15 // pred_check_branch
            %168 = sbr.rel target = $region44
          $region43: #{tpu_custom_call.1} parent=15 // pred_region
            %169 = sst [smem:[#allocation10]] [#allocation23]
            %170 = sst [smem:[#allocation11]] [#allocation22]
          $region44: #{tpu_custom_call.1} parent=15 // pred_fallthru
            _
          %172 = shalt.err (0)
          %s174 = sshll.u32 %s165, 4
          %s175 = int_to_ptr.vmem [resolvable:$true] %s174
          %177 = dma.hbm_to_vmem [thread:$0]  %s164, 16, %s175, %s166
          %s178 = sld [smem:[#allocation5 + $0x7]]
          %s179 = smul.addr %s178, 16
          %s180 = scalar_lea.hbm %s1, %s179
          %s181 = scalar_lea.vmem [#allocation2], 7
          %s182 = scalar_lea.sflag [#allocation3], 7
          // Predicated region
          $region45: #{tpu_custom_call.1} parent=15 // pred_check
            _
          $region46: #{tpu_custom_call.1} parent=15 // pred_check_branch
            %184 = sbr.rel target = $region48
          $region47: #{tpu_custom_call.1} parent=15 // pred_region
            %185 = sst [smem:[#allocation10]] [#allocation25]
            %186 = sst [smem:[#allocation11]] [#allocation24]
          $region48: #{tpu_custom_call.1} parent=15 // pred_fallthru
            _
          %188 = shalt.err (0)
          %s190 = sshll.u32 %s181, 4
          %s191 = int_to_ptr.vmem [resolvable:$true] %s190
          %193 = dma.hbm_to_vmem [thread:$0]  %s180, 16, %s191, %s182
        $region16: #{tpu_custom_call.1} parent=11 // pred_fallthru
          _
        %s194 = sadd.s32 %s15, 1
        %p195 = scmp.lt.s32.totalorder %s194, 2
        // Predicated region
        $region49: #{tpu_custom_call.1} parent=11 // pred_check
          %p196 = pneg %p195
        $region50: #{tpu_custom_call.1} parent=11 // pred_check_branch
          %198 = sbr.rel (%p196) target = $region52
        $region51: #{tpu_custom_call.1} parent=11 // pred_region
          %s199 = ssub.s32 1, %s63
          %s200 = smul.u32 %s194, 8
          %s201 = sld [smem:[#allocation5 + %s200]]
          %s202 = smul.addr %s201, 16
          %s203 = scalar_lea.hbm %s1, %s202
          %s204 = smul.u32 %s199, 8
          %s205 = scalar_lea.vmem [#allocation2], %s204
          %s206 = scalar_lea.sflag [#allocation3], %s204
          // Predicated region
          $region53: #{tpu_custom_call.1} parent=51 // pred_check
            _
          $region54: #{tpu_custom_call.1} parent=51 // pred_check_branch
            %208 = sbr.rel target = $region56
          $region55: #{tpu_custom_call.1} parent=51 // pred_region
            %209 = sst [smem:[#allocation10]] [#allocation27]
            %210 = sst [smem:[#allocation11]] [#allocation26]
          $region56: #{tpu_custom_call.1} parent=51 // pred_fallthru
            _
          %212 = shalt.err (0)
          %s214 = sshll.u32 %s205, 4
          %s215 = int_to_ptr.vmem [resolvable:$true] %s214
          %217 = dma.hbm_to_vmem [thread:$0]  %s203, 16, %s215, %s206
          %s218 = sadd.s32 %s200, 1
          %s219 = sld [smem:[#allocation5 + %s218]]
          %s220 = smul.addr %s219, 16
          %s221 = scalar_lea.hbm %s1, %s220
          %s222 = sadd.s32 1, %s204
          %s223 = scalar_lea.vmem [#allocation2], %s222
          %s224 = scalar_lea.sflag [#allocation3], %s222
          // Predicated region
          $region57: #{tpu_custom_call.1} parent=51 // pred_check
            _
          $region58: #{tpu_custom_call.1} parent=51 // pred_check_branch
            %226 = sbr.rel target = $region60
          $region59: #{tpu_custom_call.1} parent=51 // pred_region
            %227 = sst [smem:[#allocation10]] [#allocation29]
            %228 = sst [smem:[#allocation11]] [#allocation28]
          $region60: #{tpu_custom_call.1} parent=51 // pred_fallthru
            _
          %230 = shalt.err (0)
          %s232 = sshll.u32 %s223, 4
          %s233 = int_to_ptr.vmem [resolvable:$true] %s232
          %235 = dma.hbm_to_vmem [thread:$0]  %s221, 16, %s233, %s224
          %s236 = sadd.s32 %s200, 2
          %s237 = sld [smem:[#allocation5 + %s236]]
          %s238 = smul.addr %s237, 16
          %s239 = scalar_lea.hbm %s1, %s238
          %s240 = sadd.s32 2, %s204
          %s241 = scalar_lea.vmem [#allocation2], %s240
          %s242 = scalar_lea.sflag [#allocation3], %s240
          // Predicated region
          $region61: #{tpu_custom_call.1} parent=51 // pred_check
            _
          $region62: #{tpu_custom_call.1} parent=51 // pred_check_branch
            %244 = sbr.rel target = $region64
          $region63: #{tpu_custom_call.1} parent=51 // pred_region
            %245 = sst [smem:[#allocation10]] [#allocation31]
            %246 = sst [smem:[#allocation11]] [#allocation30]
          $region64: #{tpu_custom_call.1} parent=51 // pred_fallthru
            _
          %248 = shalt.err (0)
          %s250 = sshll.u32 %s241, 4
          %s251 = int_to_ptr.vmem [resolvable:$true] %s250
          %253 = dma.hbm_to_vmem [thread:$0]  %s239, 16, %s251, %s242
          %s254 = sadd.s32 %s200, 3
          %s255 = sld [smem:[#allocation5 + %s254]]
          %s256 = smul.addr %s255, 16
          %s257 = scalar_lea.hbm %s1, %s256
          %s258 = sadd.s32 3, %s204
          %s259 = scalar_lea.vmem [#allocation2], %s258
          %s260 = scalar_lea.sflag [#allocation3], %s258
          // Predicated region
          $region65: #{tpu_custom_call.1} parent=51 // pred_check
            _
          $region66: #{tpu_custom_call.1} parent=51 // pred_check_branch
            %262 = sbr.rel target = $region68
          $region67: #{tpu_custom_call.1} parent=51 // pred_region
            %263 = sst [smem:[#allocation10]] [#allocation33]
            %264 = sst [smem:[#allocation11]] [#allocation32]
          $region68: #{tpu_custom_call.1} parent=51 // pred_fallthru
            _
          %266 = shalt.err (0)
          %s268 = sshll.u32 %s259, 4
          %s269 = int_to_ptr.vmem [resolvable:$true] %s268
          %271 = dma.hbm_to_vmem [thread:$0]  %s257, 16, %s269, %s260
          %s272 = sadd.s32 %s200, 4
          %s273 = sld [smem:[#allocation5 + %s272]]
          %s274 = smul.addr %s273, 16
          %s275 = scalar_lea.hbm %s1, %s274
          %s276 = sadd.s32 4, %s204
          %s277 = scalar_lea.vmem [#allocation2], %s276
          %s278 = scalar_lea.sflag [#allocation3], %s276
          // Predicated region
          $region69: #{tpu_custom_call.1} parent=51 // pred_check
            _
          $region70: #{tpu_custom_call.1} parent=51 // pred_check_branch
            %280 = sbr.rel target = $region72
          $region71: #{tpu_custom_call.1} parent=51 // pred_region
            %281 = sst [smem:[#allocation10]] [#allocation35]
            %282 = sst [smem:[#allocation11]] [#allocation34]
          $region72: #{tpu_custom_call.1} parent=51 // pred_fallthru
            _
          %284 = shalt.err (0)
          %s286 = sshll.u32 %s277, 4
          %s287 = int_to_ptr.vmem [resolvable:$true] %s286
          %289 = dma.hbm_to_vmem [thread:$0]  %s275, 16, %s287, %s278
          %s290 = sadd.s32 %s200, 5
          %s291 = sld [smem:[#allocation5 + %s290]]
          %s292 = smul.addr %s291, 16
          %s293 = scalar_lea.hbm %s1, %s292
          %s294 = sadd.s32 5, %s204
          %s295 = scalar_lea.vmem [#allocation2], %s294
          %s296 = scalar_lea.sflag [#allocation3], %s294
          // Predicated region
          $region73: #{tpu_custom_call.1} parent=51 // pred_check
            _
          $region74: #{tpu_custom_call.1} parent=51 // pred_check_branch
            %298 = sbr.rel target = $region76
          $region75: #{tpu_custom_call.1} parent=51 // pred_region
            %299 = sst [smem:[#allocation10]] [#allocation37]
            %300 = sst [smem:[#allocation11]] [#allocation36]
          $region76: #{tpu_custom_call.1} parent=51 // pred_fallthru
            _
          %302 = shalt.err (0)
          %s304 = sshll.u32 %s295, 4
          %s305 = int_to_ptr.vmem [resolvable:$true] %s304
          %307 = dma.hbm_to_vmem [thread:$0]  %s293, 16, %s305, %s296
          %s308 = sadd.s32 %s200, 6
          %s309 = sld [smem:[#allocation5 + %s308]]
          %s310 = smul.addr %s309, 16
          %s311 = scalar_lea.hbm %s1, %s310
          %s312 = sadd.s32 6, %s204
          %s313 = scalar_lea.vmem [#allocation2], %s312
          %s314 = scalar_lea.sflag [#allocation3], %s312
          // Predicated region
          $region77: #{tpu_custom_call.1} parent=51 // pred_check
            _
          $region78: #{tpu_custom_call.1} parent=51 // pred_check_branch
            %316 = sbr.rel target = $region80
          $region79: #{tpu_custom_call.1} parent=51 // pred_region
            %317 = sst [smem:[#allocation10]] [#allocation39]
            %318 = sst [smem:[#allocation11]] [#allocation38]
          $region80: #{tpu_custom_call.1} parent=51 // pred_fallthru
            _
          %320 = shalt.err (0)
          %s322 = sshll.u32 %s313, 4
          %s323 = int_to_ptr.vmem [resolvable:$true] %s322
          %325 = dma.hbm_to_vmem [thread:$0]  %s311, 16, %s323, %s314
          %s326 = sadd.s32 %s200, 7
          %s327 = sld [smem:[#allocation5 + %s326]]
          %s328 = smul.addr %s327, 16
          %s329 = scalar_lea.hbm %s1, %s328
          %s330 = sadd.s32 7, %s204
          %s331 = scalar_lea.vmem [#allocation2], %s330
          %s332 = scalar_lea.sflag [#allocation3], %s330
          // Predicated region
          $region81: #{tpu_custom_call.1} parent=51 // pred_check
            _
          $region82: #{tpu_custom_call.1} parent=51 // pred_check_branch
            %334 = sbr.rel target = $region84
          $region83: #{tpu_custom_call.1} parent=51 // pred_region
            %335 = sst [smem:[#allocation10]] [#allocation41]
            %336 = sst [smem:[#allocation11]] [#allocation40]
          $region84: #{tpu_custom_call.1} parent=51 // pred_fallthru
            _
          %338 = shalt.err (0)
          %s340 = sshll.u32 %s331, 4
          %s341 = int_to_ptr.vmem [resolvable:$true] %s340
          %343 = dma.hbm_to_vmem [thread:$0]  %s329, 16, %s341, %s332
        $region52: #{tpu_custom_call.1} parent=11 // pred_fallthru
          _
        %s344 = smul.u32 %s63, 8
        %s345 = scalar_lea.sflag [#allocation3], %s344
        %s346 = smul.u32 1, 1
        %s347 = sshll.u32 %s346, 4
        %348 = dma.done %s345, %s347
        %s349 = sadd.s32 1, %s344
        %s350 = scalar_lea.sflag [#allocation3], %s349
        %s351 = sshll.u32 %s346, 4
        %352 = dma.done %s350, %s351
        %s353 = sadd.s32 2, %s344
        %s354 = scalar_lea.sflag [#allocation3], %s353
        %s355 = sshll.u32 %s346, 4
        %356 = dma.done %s354, %s355
        %s357 = sadd.s32 3, %s344
        %s358 = scalar_lea.sflag [#allocation3], %s357
        %s359 = sshll.u32 %s346, 4
        %360 = dma.done %s358, %s359
        %s361 = sadd.s32 4, %s344
        %s362 = scalar_lea.sflag [#allocation3], %s361
        %s363 = sshll.u32 %s346, 4
        %364 = dma.done %s362, %s363
        %s365 = sadd.s32 5, %s344
        %s366 = scalar_lea.sflag [#allocation3], %s365
        %s367 = sshll.u32 %s346, 4
        %368 = dma.done %s366, %s367
        %s369 = sadd.s32 6, %s344
        %s370 = scalar_lea.sflag [#allocation3], %s369
        %s371 = sshll.u32 %s346, 4
        %372 = dma.done %s370, %s371
        %s373 = sadd.s32 7, %s344
        %s374 = scalar_lea.sflag [#allocation3], %s373
        %s375 = sshll.u32 %s346, 4
        %376 = dma.done %s374, %s375
        %s377 = scalar_lea.vmem [#allocation2], %s344
        %v378 = vld [vmem:[%s377] sm:$0xff]
        %v379 = vmul.f32 %v378, 11.313708
        %380 = vst [vmem:[%s51] sm:$0xff] %v379
        %s381 = sand.u32 %s24, 1
        %s382 = scalar_lea.sflag [#allocation7], %s381
        %s383 = sand.u32 %s24, 1
        %s384 = smul.addr %s383, 8
        %s385 = scalar_lea.vmem [#allocation6], %s384
        // Predicated region
        $region85: #{tpu_custom_call.1} parent=11 // pred_check
          %p386 = pneg %p30
        $region86: #{tpu_custom_call.1} parent=11 // pred_check_branch
          %388 = sbr.rel (%p386) target = $region88
        $region87: #{tpu_custom_call.1} parent=11 // pred_region
          %s390 = ssub.s32 128, 128
          %391 = vsyncadd %s382, %s390
          %s392 = smul.addr %s15, 128
          %s393 = scalar_lea.hbm %s2, %s392
          %s395 = sshll.u32 %s385, 4
          %s396 = int_to_ptr.vmem [resolvable:$true] %s395
          %398 = dma.vmem_to_hbm [thread:$0]  %s396, 128, %s393, %s382
        $region88: #{tpu_custom_call.1} parent=11 // pred_fallthru
          _
      $region12: #{tpu_custom_call.1} parent=5 // pred_fallthru
        _
      %p399 = scmp.le.s32.totalorder 1, %s15
      // Predicated region
      $region89: #{tpu_custom_call.1} parent=5 // pred_check
        %p400 = pneg %p399
      $region90: #{tpu_custom_call.1} parent=5 // pred_check_branch
        %402 = sbr.rel (%p400) target = $region92
      $region91: #{tpu_custom_call.1} parent=5 // pred_region
        %s403 = ssub.s32 %s15, 1
        // Predicated region
        $region93: #{tpu_custom_call.1} parent=91 // pred_check
          %p404 = pneg %p36
        $region94: #{tpu_custom_call.1} parent=91 // pred_check_branch
          %406 = sbr.rel (%p404) target = $region96
        $region95: #{tpu_custom_call.1} parent=91 // pred_region
          %s407 = sand.u32 %s27, 1
          %s408 = scalar_lea.sflag [#allocation7], %s407
          %s409 = sand.u32 %s27, 1
          %s410 = smul.addr %s409, 8
          %s411 = scalar_lea.vmem [#allocation6], %s410
          %412 = dma.done %s408, 128
        $region96: #{tpu_custom_call.1} parent=91 // pred_fallthru
          _
      $region92: #{tpu_custom_call.1} parent=5 // pred_fallthru
        _
    $region6: #{tpu_custom_call.1} parent=1 // loop_footer
      %s19 = sadd.s32 1, %s15
    $region7: #{tpu_custom_call.1} parent=1 // loop_footer_branch
      %14 = sbr.rel target = $region3
    $region8: #{tpu_custom_call.1} parent=1 // loop_exit
      _
    %413 = vsyncpa [#allocation7], 1
    %s414 = scalar_lea.sflag [#allocation7], 1
    %415 = vsyncpa %s414, 1
  %416 = vsyncmov [#allocation3]
  %s417 = vpop.sfrf %416
  %p418 = scmp.eq.s32.totalorder %s417, 0
  %p419 = pneg %p418
  %421 = shalt.err (%p419)
  %s422 = scalar_lea.sflag [#allocation3], 1
  %423 = vsyncmov %s422
  %s424 = vpop.sfrf %423
  %p425 = scmp.eq.s32.totalorder %s424, 0
  %p426 = pneg %p425
  %428 = shalt.err (%p426)
  %s429 = scalar_lea.sflag [#allocation3], 2
  %430 = vsyncmov %s429
  %s431 = vpop.sfrf %430
  %p432 = scmp.eq.s32.totalorder %s431, 0
  %p433 = pneg %p432
  %435 = shalt.err (%p433)
  %s436 = scalar_lea.sflag [#allocation3], 3
  %437 = vsyncmov %s436
  %s438 = vpop.sfrf %437
  %p439 = scmp.eq.s32.totalorder %s438, 0
  %p440 = pneg %p439
  %442 = shalt.err (%p440)
  %s443 = scalar_lea.sflag [#allocation3], 4
  %444 = vsyncmov %s443
  %s445 = vpop.sfrf %444
  %p446 = scmp.eq.s32.totalorder %s445, 0
  %p447 = pneg %p446
  %449 = shalt.err (%p447)
  %s450 = scalar_lea.sflag [#allocation3], 5
  %451 = vsyncmov %s450
  %s452 = vpop.sfrf %451
  %p453 = scmp.eq.s32.totalorder %s452, 0
  %p454 = pneg %p453
  %456 = shalt.err (%p454)
  %s457 = scalar_lea.sflag [#allocation3], 6
  %458 = vsyncmov %s457
  %s459 = vpop.sfrf %458
  %p460 = scmp.eq.s32.totalorder %s459, 0
  %p461 = pneg %p460
  %463 = shalt.err (%p461)
  %s464 = scalar_lea.sflag [#allocation3], 7
  %465 = vsyncmov %s464
  %s466 = vpop.sfrf %465
  %p467 = scmp.eq.s32.totalorder %s466, 0
  %p468 = pneg %p467
  %470 = shalt.err (%p468)
  %s471 = scalar_lea.sflag [#allocation3], 8
  %472 = vsyncmov %s471
  %s473 = vpop.sfrf %472
  %p474 = scmp.eq.s32.totalorder %s473, 0
  %p475 = pneg %p474
  %477 = shalt.err (%p475)
  %s478 = scalar_lea.sflag [#allocation3], 9
  %479 = vsyncmov %s478
  %s480 = vpop.sfrf %479
  %p481 = scmp.eq.s32.totalorder %s480, 0
  %p482 = pneg %p481
  %484 = shalt.err (%p482)
  %s485 = scalar_lea.sflag [#allocation3], 10
  %486 = vsyncmov %s485
  %s487 = vpop.sfrf %486
  %p488 = scmp.eq.s32.totalorder %s487, 0
  %p489 = pneg %p488
  %491 = shalt.err (%p489)
  %s492 = scalar_lea.sflag [#allocation3], 11
  %493 = vsyncmov %s492
  %s494 = vpop.sfrf %493
  %p495 = scmp.eq.s32.totalorder %s494, 0
  %p496 = pneg %p495
  %498 = shalt.err (%p496)
  %s499 = scalar_lea.sflag [#allocation3], 12
  %500 = vsyncmov %s499
  %s501 = vpop.sfrf %500
  %p502 = scmp.eq.s32.totalorder %s501, 0
  %p503 = pneg %p502
  %505 = shalt.err (%p503)
  %s506 = scalar_lea.sflag [#allocation3], 13
  %507 = vsyncmov %s506
  %s508 = vpop.sfrf %507
  %p509 = scmp.eq.s32.totalorder %s508, 0
  %p510 = pneg %p509
  %512 = shalt.err (%p510)
  %s513 = scalar_lea.sflag [#allocation3], 14
  %514 = vsyncmov %s513
  %s515 = vpop.sfrf %514
  %p516 = scmp.eq.s32.totalorder %s515, 0
  %p517 = pneg %p516
  %519 = shalt.err (%p517)
  %s520 = scalar_lea.sflag [#allocation3], 15
  %521 = vsyncmov %s520
  %s522 = vpop.sfrf %521
  %p523 = scmp.eq.s32.totalorder %s522, 0
  %p524 = pneg %p523
  %526 = shalt.err (%p524)

</llo_original>
